<compile_context>
chip_gen: v5e
topology: v5e:2x2
jax: 0.10.0
libtpu: 0.0.40
codegen_flags: <defaults>
</compile_context>

<pallas_src>
import functools
import math

import jax
import jax.numpy as jnp
from jax.experimental import pallas as pl
from jax.experimental.pallas import tpu as pltpu


# ---------------------------------------------------------------------------
# Kernels
# ---------------------------------------------------------------------------

def _swiglu_split_kernel(x1_ref, x2_ref, o_ref, *, approx):
    """Fast path: x1_ref, x2_ref, o_ref are (TM, TH) lane-dense tiles."""
    x1 = x1_ref[...].astype(jnp.float32)
    x2 = x2_ref[...].astype(jnp.float32)
    # sigmoid(x2) = 1 / (1 + exp(-x2)); exp and reciprocal both live in the
    # EUP slot (VALU stays free), product stays in f32, single final cast.
    silu = x2 * pl.reciprocal(1.0 + jnp.exp(-x2), approx=approx)
    o_ref[...] = (x1 * silu).astype(o_ref.dtype)


def _swiglu_fused_kernel(x_ref, o_ref, *, approx):
    """Fallback (tiny-shape) path: x_ref is (TM, H), o_ref is (TM, H // 2)."""
    half = x_ref.shape[-1] // 2
    x1 = x_ref[:, :half].astype(jnp.float32)
    x2 = x_ref[:, half:].astype(jnp.float32)
    silu = x2 * pl.reciprocal(1.0 + jnp.exp(-x2), approx=approx)
    o_ref[...] = (x1 * silu).astype(o_ref.dtype)


# ---------------------------------------------------------------------------
# Generation-aware VMEM / tiling helpers
# ---------------------------------------------------------------------------

def _tpu_vmem_capacity_bytes() -> int:
    """Per-core VMEM; conservative (v7x-sized) fallback if the query fails."""
    try:
        return int(pltpu.get_tpu_info().vmem_capacity_bytes)
    except Exception:
        return 64 << 20


def _pick_col_tile(half: int, max_col_tile: int) -> int:
    """half % 128 == 0. Prefer large lane-dense tiles; never collapse to 128."""
    cap = max(128, (max_col_tile // 128) * 128)
    if half <= cap:
        return half
    # Largest multiple-of-128 divisor of `half` not exceeding the cap.
    best = 128
    for th in range(cap, 127, -128):
        if half % th == 0:
            best = th
            break
    if best >= 1024:
        return best
    # Awkward `half` with no good divisor: take a full-width tile when it still
    # fits VMEM comfortably rather than a narrow 128-lane stripe.
    if half <= 8192:
        return half
    return best


# ---------------------------------------------------------------------------
# Wrappers
# ---------------------------------------------------------------------------

def _swiglu_lane_aligned(x2d, half, rows, dt_bytes, row_align, row_tile,
                         max_col_tile, tile_budget, scoped_cap, approx):
    """Fast path: dual-view column split, row+column tiled, no padding copies."""
    th = _pick_col_tile(half, max_col_tile)
    nj = half // th
    assert nj * th == half  # x2 offset (j + nj) must land exactly at `half`

    # 2 input tiles + 1 output tile, each double-buffered -> 6 live tiles.
    max_tm = max(row_align, tile_budget // (6 * th * dt_bytes))
    tm = min(row_tile, rows, max_tm)
    tm = max(row_align, (tm // row_align) * row_align)

    grid = (pl.cdiv(rows, tm), nj)  # ragged last row block masked by Pallas
    tile_bytes = 6 * tm * th * dt_bytes
    vmem_limit = int(min(scoped_cap, max(32 << 20, tile_bytes + (16 << 20))))

    kernel = functools.partial(_swiglu_split_kernel, approx=approx)
    return pl.pallas_call(
        kernel,
        out_shape=jax.ShapeDtypeStruct((rows, half), x2d.dtype),
        grid=grid,
        in_specs=[
            pl.BlockSpec((tm, th), lambda i, j: (i, j)),        # x1: cols [0, half)
            pl.BlockSpec((tm, th), lambda i, j: (i, j + nj)),   # x2: cols [half, 2*half)
        ],
        out_specs=pl.BlockSpec((tm, th), lambda i, j: (i, j)),
        compiler_params=pltpu.CompilerParams(
            dimension_semantics=("parallel", "parallel"),
            vmem_limit_bytes=vmem_limit),
    )(x2d, x2d)
    # TODO(synk): optionally pipeline_mode=pl.Buffered(3) on v7x when headroom
    # remains below the 48 MiB scoped cap (expected gain only a few %).


def _swiglu_rowtiled_fused(x2d, half, rows, dt_bytes, row_align, row_tile,
                           tile_budget, scoped_cap, approx):
    """Fallback: row-tiled only; last block dims equal the full array dims."""
    hidden = 2 * half
    if rows <= row_align:
        tm = rows                                   # single full block
    else:
        # in tile (tm*hidden) + out tile (tm*half) = 1.5*tm*hidden, x2 buffers.
        max_tm = max(row_align, tile_budget // (3 * hidden * dt_bytes))
        tm = min(row_tile, rows, max_tm)
        tm = max(row_align, (tm // row_align) * row_align)

    grid = (pl.cdiv(rows, tm),)
    tile_bytes = 3 * tm * hidden * dt_bytes
    vmem_limit = int(min(scoped_cap, max(32 << 20, tile_bytes + (16 << 20))))

    kernel = functools.partial(_swiglu_fused_kernel, approx=approx)
    return pl.pallas_call(
        kernel,
        out_shape=jax.ShapeDtypeStruct((rows, half), x2d.dtype),
        grid=grid,
        in_specs=[pl.BlockSpec((tm, hidden), lambda i: (i, 0))],
        out_specs=pl.BlockSpec((tm, half), lambda i: (i, 0)),
        compiler_params=pltpu.CompilerParams(
            dimension_semantics=("parallel",),
            vmem_limit_bytes=vmem_limit),
    )(x2d)


def swiglu(x: jax.Array, *, row_tile: int | None = None,
           max_col_tile: int = 2048, vmem_budget_bytes: int | None = None,
           approx_reciprocal: bool = True) -> jax.Array:
    """x: [..., hidden] (hidden even) -> [..., hidden // 2] = x1 * silu(x2)."""
    *lead, hidden = x.shape
    assert hidden % 2 == 0, "last dim must be even for SwiGLU"
    half = hidden // 2

    rows = math.prod(lead) if lead else 1
    x2d = x.reshape(rows, hidden)

    dt_bytes = jnp.dtype(x.dtype).itemsize
    # Sublane packing: 8 rows/vreg for 32-bit, 16 for bf16, 32 for 8-bit.
    row_align = 8 * max(1, 4 // dt_bytes)

    # Generation-aware VMEM budgeting: ~75% of per-TC VMEM as the scoped cap
    # (~48 MiB on v7x, ~96 MiB on v5e/v6e), bigger tiles on 128 MiB parts.
    vmem_phys = _tpu_vmem_capacity_bytes()
    scoped_cap = (vmem_phys * 3) // 4
    big_vmem = vmem_phys >= (96 << 20)
    if row_tile is None:
        row_tile = 1024 if big_vmem else 512
    if vmem_budget_bytes is None:
        vmem_budget_bytes = (48 << 20) if big_vmem else (24 << 20)
    tile_budget = max(1 << 20, min(vmem_budget_bytes, scoped_cap - (16 << 20)))

    if half % 128 == 0 and rows >= row_align:
        out2d = _swiglu_lane_aligned(x2d, half, rows, dt_bytes, row_align,
                                     row_tile, max_col_tile, tile_budget,
                                     scoped_cap, approx_reciprocal)
    else:
        # TODO(synk): large non-128-aligned halves would be store/XLU-limited
        # here; they would need a wrapper relayout to a lane-dense output slab.
        out2d = _swiglu_rowtiled_fused(x2d, half, rows, dt_bytes, row_align,
                                       row_tile, tile_budget, scoped_cap,
                                       approx_reciprocal)

    return out2d.reshape(*lead, half)


# ---------------------------------------------------------------------------
# Demo / correctness check
# ---------------------------------------------------------------------------

if __name__ == "__main__":
    key = jax.random.PRNGKey(0)
    k1, k2, k3, k4 = jax.random.split(key, 4)

    def ref_swiglu(x):
        x32 = x.astype(jnp.float32)
        x1, x2 = jnp.split(x32, 2, axis=-1)
        return x1 * (x2 * jax.nn.sigmoid(x2))

    # 1) Small module-spec shape (half=32, not lane-aligned) -> fused fallback.
    x_a = jax.random.normal(k1, (2, 8, 64), dtype=jnp.float32)
    out_a = swiglu(x_a)
    jax.block_until_ready(out_a)
    assert out_a.shape == (2, 8, 32), out_a.shape
    assert jnp.allclose(out_a, ref_swiglu(x_a), atol=1e-2, rtol=1e-2)

    # 1b) Same shape with exact reciprocal -> tight-tolerance correctness check.
    out_a_exact = swiglu(x_a, approx_reciprocal=False)
    jax.block_until_ready(out_a_exact)
    assert jnp.allclose(out_a_exact, ref_swiglu(x_a), atol=1e-5, rtol=1e-5)

    # 2) Lane-aligned half (128) with ragged rows -> split fast path, no padding.
    x_b = jax.random.normal(k2, (3, 41, 256), dtype=jnp.float32)
    out_b = swiglu(x_b)
    jax.block_until_ready(out_b)
    assert out_b.shape == (3, 41, 128), out_b.shape
    assert jnp.allclose(out_b, ref_swiglu(x_b), atol=1e-2, rtol=1e-2)

    # 3) Multiple column blocks + ragged rows (half=2048, column tile 1024).
    x_c = jax.random.normal(k3, (2, 50, 4096), dtype=jnp.float32)
    out_c = swiglu(x_c, max_col_tile=1024)
    jax.block_until_ready(out_c)
    assert out_c.shape == (2, 50, 2048), out_c.shape
    assert jnp.allclose(out_c, ref_swiglu(x_c), atol=1e-2, rtol=1e-2)

    # 4) bf16 path (f32 gate math, single final cast), ragged rows.
    x_d = jax.random.normal(k4, (4, 33, 256), dtype=jnp.bfloat16)
    out_d = swiglu(x_d)
    jax.block_until_ready(out_d)
    assert out_d.shape == (4, 33, 128), out_d.shape
    assert jnp.allclose(out_d.astype(jnp.float32), ref_swiglu(x_d),
                        atol=5e-2, rtol=5e-2)

    print("KERNEL_OK")
</pallas_src>

<mosaic_0001>
module attributes {stable_mosaic.version = 11 : i64} {
  func.func @_swiglu_fused_kernel(%arg0: i32, %arg1: memref<16x64xf32, #tpu.memory_space<vmem>>, %arg2: memref<16x32xf32, #tpu.memory_space<vmem>>) attributes {dimension_semantics = [#tpu.dimension_semantics<parallel>], iteration_bounds = array<i64: 1>, scalar_prefetch = 0 : i64, scratch_operands = 0 : i64, tpu.core_type = #tpu.core_type<tc>, window_params = [{transform_indices = @transform_0, window_bounds = array<i64: 16, 64>}, {transform_indices = @transform_1, window_bounds = array<i64: 16, 32>}]} {
    %c0 = arith.constant 0 : index
    %c0_0 = arith.constant 0 : index
    %0 = vector.load %arg1[%c0, %c0_0] : memref<16x64xf32, #tpu.memory_space<vmem>>, vector<16x32xf32>
    %c0_1 = arith.constant 0 : index
    %c32 = arith.constant 32 : index
    %1 = vector.load %arg1[%c0_1, %c32] : memref<16x64xf32, #tpu.memory_space<vmem>>, vector<16x32xf32>
    %cst = arith.constant 0.000000e+00 : f32
    %2 = vector.broadcast %cst : f32 to vector<16x32xf32>
    %3 = arith.subf %2, %1 : vector<16x32xf32>
    %4 = math.exp %3 : vector<16x32xf32>
    %cst_2 = arith.constant 1.000000e+00 : f32
    %5 = vector.broadcast %cst_2 : f32 to vector<16x32xf32>
    %6 = arith.addf %5, %4 : vector<16x32xf32>
    %7 = tpu.reciprocal %6 {approx = true} : vector<16x32xf32> -> vector<16x32xf32>
    %8 = arith.mulf %1, %7 : vector<16x32xf32>
    %9 = arith.mulf %0, %8 : vector<16x32xf32>
    %c0_3 = arith.constant 0 : index
    %c0_4 = arith.constant 0 : index
    %10 = vector.load %arg2[%c0_3, %c0_4] : memref<16x32xf32, #tpu.memory_space<vmem>>, vector<16x32xf32>
    tpu.vector_store %arg2[%c0_3, %c0_4], %9 {strides = array<i32>} : memref<16x32xf32, #tpu.memory_space<vmem>>, vector<16x32xf32>,
    return
  }
  func.func @transform_0(%arg0: i32) -> (i32, i32) {
    %c0_i32 = arith.constant 0 : i32
    %c0_i32_0 = arith.constant 0 : i32
    return %arg0, %c0_i32 : i32, i32
  }
  func.func @transform_1(%arg0: i32) -> (i32, i32) {
    %c0_i32 = arith.constant 0 : i32
    %c0_i32_0 = arith.constant 0 : i32
    return %arg0, %c0_i32 : i32, i32
  }
}

</mosaic_0001>

<llo_original>
// kernel: tpu_custom_call.1
$region0: #{tpu_custom_call.1}
  #allocation0 [shape = 'u32[]', space=smem, size = 0x4, offset = 0x4, fixed_abs, tag = 'smem constant byte address 0x4 - core index']
  #allocation1 [shape = 'u32[72,128]{1,0:T(1,128)}', space=vmem, size = 0x9000, scoped, tag = 'internal scratch']
  %s0 = inlined_call_operand.hbm [shape: f32[16,64], index: 0, kind: input, shape index: {}]
  %s1 = inlined_call_operand.hbm [shape: f32[16,32], index: 1, kind: output, shape index: {}]
  %s2 = sld [smem:[#allocation0]]
  $region18: #{tpu_custom_call.1} parent=0
    _
  %s4 = ssub.s32 1, %s2
  %s5 = scalar_select 0, %s4, %s2
  $region1: #{tpu_custom_call.1} parent=0
    #allocation2 [shape = 'u8[8192]{0}', space=vmem, size = 0x2000, scoped, tag = 'input window, operand 0, single buffered']
    #allocation3 [shape = 's32[1]{0}', space=sflag, size = 0x4, scoped, tag = 'scoped memory for tpu_custom_call.1']
    #allocation4 [shape = 's32[1]{0}', space=sflag, size = 0x4, scoped, tag = 'scoped memory for tpu_custom_call.1']
    #allocation5 [shape = 'u8[8192]{0}', space=vmem, size = 0x2000, scoped, tag = 'output window, operand 0, single buffered']
    %6 = vsyncpa [#allocation3], 0
    %7 = vsyncpa [#allocation4], 0
    // Predicated region
    $region2: #{tpu_custom_call.1} parent=1 // pred_check
      _
    $region3: #{tpu_custom_call.1} parent=1 // pred_check_branch
      %9 = sbr.rel (0) target = $region5
    $region4: #{tpu_custom_call.1} parent=1 // pred_region
      %11 = vsyncadd [#allocation3], 0
      %s12 = sshll.u32 %s0, 4
      %s13 = int_to_ptr.hbm [resolvable:$true] %s12
      %s14 = sshll.u32 [#allocation2], 4
      %s15 = int_to_ptr.vmem [resolvable:$true] %s14
      %20 = dma.hbm_to_vmem [thread:$0]  %s13, 256, %s15, [#allocation3], 128, 128, 8
    $region5: #{tpu_custom_call.1} parent=1 // pred_fallthru
      _
    // Predicated region
    $region6: #{tpu_custom_call.1} parent=1 // pred_check
      _
    $region7: #{tpu_custom_call.1} parent=1 // pred_check_branch
      %22 = sbr.rel (0) target = $region9
    $region8: #{tpu_custom_call.1} parent=1 // pred_region
      %24 = dma.done [#allocation3], 256
    $region9: #{tpu_custom_call.1} parent=1 // pred_fallthru
      _
    %v25 = vld [vmem:[#allocation2] sm:$0xff]
    %v26 = vld [vmem:[#allocation2 + $0x8] sm:$0xff]
    %v27 = vsub.f32 0.0, %v25
    %v28 = vsub.f32 0.0, %v26
    %v29 = vmul.f32 %v27, 1.442695
    %v30 = vpow.pop %v29
    %v31 = vmul.f32 %v28, 1.442695
    %v32 = vpow.pop %v31
    %v33 = vadd.f32 %v30, 1.0
    %v34 = vadd.f32 %v32, 1.0
    %v35 = vrcp.pop %v33
    %v36 = vrcp.pop %v34
    %v37 = vmul.f32 %v25, %v35
    %v38 = vmul.f32 %v26, %v36
    %41 = vrot.lane.b32.xlu0 %v37, 96
    %v42 = vpop.permute.xlu0 %41
    %43 = vrot.lane.b32.xlu0 %v38, 96
    %v44 = vpop.permute.xlu0 %43
    %v47 = vmul.f32 %v25, %v42
    %v48 = vmul.f32 %v26, %v44
    %vm49 = vcmask 261120
    %50 = vst.msk [vmem:[#allocation5] sm:$0xff] %vm49, %v47
    %51 = vst.msk [vmem:[#allocation5 + $0x8] sm:$0xff] %vm49, %v48
    // Predicated region
    $region10: #{tpu_custom_call.1} parent=1 // pred_check
      _
    $region11: #{tpu_custom_call.1} parent=1 // pred_check_branch
      %53 = sbr.rel (0) target = $region13
    $region12: #{tpu_custom_call.1} parent=1 // pred_region
      %55 = vsyncadd [#allocation4], 0
      %s56 = sshll.u32 [#allocation5], 4
      %s57 = int_to_ptr.vmem [resolvable:$true] %s56
      %s58 = sshll.u32 %s1, 4
      %s59 = int_to_ptr.hbm [resolvable:$true] %s58
      %64 = dma.vmem_to_hbm [thread:$0]  %s57, 256, %s59, [#allocation4], 128, 128, 8
    $region13: #{tpu_custom_call.1} parent=1 // pred_fallthru
      _
    // Predicated region
    $region14: #{tpu_custom_call.1} parent=1 // pred_check
      _
    $region15: #{tpu_custom_call.1} parent=1 // pred_check_branch
      %66 = sbr.rel (0) target = $region17
    $region16: #{tpu_custom_call.1} parent=1 // pred_region
      %68 = dma.done [#allocation4], 256
    $region17: #{tpu_custom_call.1} parent=1 // pred_fallthru
      _
    %69 = vsyncpa [#allocation3], 1
    %70 = vsyncpa [#allocation4], 1

</llo_original>
